<compile_context>
chip_gen: v7x
topology: tpu7x:2x2x1
jax: 0.10.0
libtpu: 0.0.40
codegen_flags: <defaults>
</compile_context>

<pallas_src>
import functools

import jax
import jax.numpy as jnp
from jax.experimental import pallas as pl
from jax.experimental.pallas import tpu as pltpu


def _round_up(x, m):
    return (x + m - 1) // m * m


def _contrastive_loss_kernel(o1_ref, o2_ref, t_ref, loss_ref, *, margin, eps):
    # Cast after load (keeps HBM traffic at native width; VPU math in f32).
    o1 = o1_ref[...].astype(jnp.float32)                     # (TB, D)
    o2 = o2_ref[...].astype(jnp.float32)                     # (TB, D)
    diff = o2 - o1
    distances = jnp.sum(diff * diff, axis=1, keepdims=True)  # (TB, 1) f32

    t = t_ref[...]                                           # (TB, 1) f32
    hinge = jnp.maximum(margin - jnp.sqrt(distances + eps), 0.0)
    loss_ref[...] = 0.5 * (t * distances + (1.0 - t) * hinge * hinge)


def contrastive_loss(output1, output2, target, margin, eps=1e-9, size_average=True):
    """Pallas implementation of ContrastiveLoss.forward.

    output1, output2: (B, D) embeddings (any float dtype).
    target:           (B,)   labels (1 = same class, 0 = different).
    Returns a scalar (mean if size_average else sum).
    """
    B, D = output1.shape
    itemsize = jnp.dtype(output1.dtype).itemsize

    # Pick a batch tile: large enough to pipeline well, small enough that the
    # double-buffered input footprint (2 embeddings x 2 buffers x TB*D*itemsize)
    # stays under ~8 MiB (safe for v5e's 16 MiB scoped VMEM default).
    vmem_budget = 8 * 1024 * 1024
    tb_cap = max(8, (vmem_budget // (2 * 2 * D * itemsize)) // 8 * 8)
    TB = int(min(512, tb_cap, _round_up(B, 8)))
    B_pad = _round_up(B, TB)

    o1, o2 = output1, output2            # native dtype; cast happens in-kernel
    t = target.astype(jnp.float32).reshape(B, 1)
    if B_pad != B:
        pad = B_pad - B
        o1 = jnp.pad(o1, ((0, pad), (0, 0)))
        o2 = jnp.pad(o2, ((0, pad), (0, 0)))
        t = jnp.pad(t, ((0, pad), (0, 0)))   # padded rows sliced off below

    kernel = functools.partial(
        _contrastive_loss_kernel, margin=float(margin), eps=float(eps)
    )

    num_tiles = B_pad // TB
    # TODO(synk): for very large D, add an innermost 'arbitrary' grid axis over
    # D with a (TB, 1) VMEM scratch accumulating partial squared distances.
    losses = pl.pallas_call(
        kernel,
        out_shape=jax.ShapeDtypeStruct((B_pad, 1), jnp.float32),
        grid_spec=pltpu.PrefetchScalarGridSpec(
            num_scalar_prefetch=0,
            grid=(num_tiles,),
            in_specs=[
                pl.BlockSpec((TB, D), lambda i: (i, 0)),
                pl.BlockSpec((TB, D), lambda i: (i, 0)),
                pl.BlockSpec((TB, 1), lambda i: (i, 0)),
            ],
            out_specs=pl.BlockSpec((TB, 1), lambda i: (i, 0)),
        ),
        compiler_params=pltpu.CompilerParams(
            dimension_semantics=("parallel",)
        ),
    )(o1, o2, t)

    total = jnp.sum(losses[:B, 0])
    if size_average:
        return total * (1.0 / B)      # multiply by precomputed reciprocal
    return total                      # true sum (matches reference exactly)


def _reference(output1, output2, target, margin, eps=1e-9, size_average=True):
    o1 = output1.astype(jnp.float32)
    o2 = output2.astype(jnp.float32)
    distances = jnp.sum((o2 - o1) ** 2, axis=1)
    t = target.astype(jnp.float32)
    hinge = jnp.maximum(margin - jnp.sqrt(distances + eps), 0.0)
    losses = 0.5 * (t * distances + (1.0 - t) * hinge ** 2)
    return jnp.mean(losses) if size_average else jnp.sum(losses)


if __name__ == "__main__":
    key = jax.random.PRNGKey(0)
    k1, k2, k3 = jax.random.split(key, 3)

    B, D = 8, 32          # batch of embedding pairs, hidden size
    margin = 1.0

    output1 = jax.random.normal(k1, (B, D), dtype=jnp.float32)
    output2 = jax.random.normal(k2, (B, D), dtype=jnp.float32)
    target = jax.random.bernoulli(k3, p=0.5, shape=(B,)).astype(jnp.int32)

    # size_average=True (mean)
    loss = contrastive_loss(output1, output2, target, margin)
    loss = jax.block_until_ready(loss)
    ref = _reference(output1, output2, target, margin)
    assert jnp.allclose(loss, ref, rtol=1e-5, atol=1e-6), (loss, ref)

    # size_average=False (sum)
    loss_sum = contrastive_loss(output1, output2, target, margin, size_average=False)
    loss_sum = jax.block_until_ready(loss_sum)
    ref_sum = _reference(output1, output2, target, margin, size_average=False)
    assert jnp.allclose(loss_sum, ref_sum, rtol=1e-5, atol=1e-6), (loss_sum, ref_sum)

    print("KERNEL_OK")
</pallas_src>

<mosaic_0001>
module attributes {stable_mosaic.version = 11 : i64} {
  func.func @_contrastive_loss_kernel(%arg0: i32, %arg1: memref<8x32xf32, #tpu.memory_space<vmem>>, %arg2: memref<8x32xf32, #tpu.memory_space<vmem>>, %arg3: memref<8x1xf32, #tpu.memory_space<vmem>>, %arg4: memref<8x1xf32, #tpu.memory_space<vmem>>) attributes {dimension_semantics = [#tpu.dimension_semantics<parallel>], iteration_bounds = array<i64: 1>, scalar_prefetch = 0 : i64, scratch_operands = 0 : i64, tpu.core_type = #tpu.core_type<tc>, window_params = [{transform_indices = @transform_0, window_bounds = array<i64: 8, 32>}, {transform_indices = @transform_1, window_bounds = array<i64: 8, 32>}, {transform_indices = @transform_2, window_bounds = array<i64: 8, 1>}, {transform_indices = @transform_3, window_bounds = array<i64: 8, 1>}]} {
    %c0 = arith.constant 0 : index
    %c0_0 = arith.constant 0 : index
    %0 = vector.load %arg1[%c0, %c0_0] : memref<8x32xf32, #tpu.memory_space<vmem>>, vector<8x32xf32>
    %c0_1 = arith.constant 0 : index
    %c0_2 = arith.constant 0 : index
    %1 = vector.load %arg2[%c0_1, %c0_2] : memref<8x32xf32, #tpu.memory_space<vmem>>, vector<8x32xf32>
    %2 = arith.subf %1, %0 : vector<8x32xf32>
    %3 = arith.mulf %2, %2 : vector<8x32xf32>
    %cst = arith.constant dense<0.000000e+00> : vector<8xf32>
    %4 = vector.multi_reduction <add>, %3, %cst [1] : vector<8x32xf32> to vector<8xf32>
    %5 = vector.shape_cast %4 : vector<8xf32> to vector<8x1xf32>
    %c0_3 = arith.constant 0 : index
    %c0_4 = arith.constant 0 : index
    %6 = vector.load %arg3[%c0_3, %c0_4] : memref<8x1xf32, #tpu.memory_space<vmem>>, vector<8x1xf32>
    %cst_5 = arith.constant 9.99999971E-10 : f32
    %7 = vector.broadcast %cst_5 : f32 to vector<8x1xf32>
    %8 = arith.addf %5, %7 : vector<8x1xf32>
    %9 = math.sqrt %8 : vector<8x1xf32>
    %cst_6 = arith.constant 1.000000e+00 : f32
    %10 = vector.broadcast %cst_6 : f32 to vector<8x1xf32>
    %11 = arith.subf %10, %9 : vector<8x1xf32>
    %cst_7 = arith.constant 0.000000e+00 : f32
    %12 = vector.broadcast %cst_7 : f32 to vector<8x1xf32>
    %13 = arith.maximumf %11, %12 : vector<8x1xf32>
    %14 = arith.mulf %6, %5 : vector<8x1xf32>
    %cst_8 = arith.constant 1.000000e+00 : f32
    %15 = vector.broadcast %cst_8 : f32 to vector<8x1xf32>
    %16 = arith.subf %15, %6 : vector<8x1xf32>
    %17 = arith.mulf %16, %13 : vector<8x1xf32>
    %18 = arith.mulf %17, %13 : vector<8x1xf32>
    %19 = arith.addf %14, %18 : vector<8x1xf32>
    %cst_9 = arith.constant 5.000000e-01 : f32
    %20 = vector.broadcast %cst_9 : f32 to vector<8x1xf32>
    %21 = arith.mulf %20, %19 : vector<8x1xf32>
    %c0_10 = arith.constant 0 : index
    %c0_11 = arith.constant 0 : index
    %22 = vector.load %arg4[%c0_10, %c0_11] : memref<8x1xf32, #tpu.memory_space<vmem>>, vector<8x1xf32>
    tpu.vector_store %arg4[%c0_10, %c0_11], %21 {strides = array<i32>} : memref<8x1xf32, #tpu.memory_space<vmem>>, vector<8x1xf32>,
    return
  }
  func.func @transform_0(%arg0: i32) -> (i32, i32) {
    %c0_i32 = arith.constant 0 : i32
    %c0_i32_0 = arith.constant 0 : i32
    return %arg0, %c0_i32 : i32, i32
  }
  func.func @transform_1(%arg0: i32) -> (i32, i32) {
    %c0_i32 = arith.constant 0 : i32
    %c0_i32_0 = arith.constant 0 : i32
    return %arg0, %c0_i32 : i32, i32
  }
  func.func @transform_2(%arg0: i32) -> (i32, i32) {
    %c0_i32 = arith.constant 0 : i32
    %c0_i32_0 = arith.constant 0 : i32
    return %arg0, %c0_i32 : i32, i32
  }
  func.func @transform_3(%arg0: i32) -> (i32, i32) {
    %c0_i32 = arith.constant 0 : i32
    %c0_i32_0 = arith.constant 0 : i32
    return %arg0, %c0_i32 : i32, i32
  }
}

</mosaic_0001>

<llo_original>
// kernel: tpu_custom_call.1
$region0: #{tpu_custom_call.1}
  #allocation0 [shape = 'u32[]', space=smem, size = 0x4, offset = 0x4, fixed_abs, tag = 'smem constant byte address 0x4 - core index']
  #allocation1 [shape = 'u32[144,128]{1,0:T(1,128)}', space=vmem, size = 0x12000, scoped, tag = 'internal scratch']
  %s0 = inlined_call_operand.vmem [shape: f32[8,32], index: 0, kind: input, shape index: {}]
  %s1 = inlined_call_operand.hbm [shape: f32[8,32], index: 1, kind: input, shape index: {}]
  %s2 = inlined_call_operand.vmem [shape: f32[8,1], index: 2, kind: input, shape index: {}]
  %s3 = inlined_call_operand.vmem [shape: f32[8,1], index: 3, kind: output, shape index: {}]
  %s4 = sld [smem:[#allocation0]]
  $region26: #{tpu_custom_call.1} parent=0
    _
  %s6 = ssub.s32 1, %s4
  %s7 = scalar_select 0, %s6, %s4
  $region1: #{tpu_custom_call.1} parent=0
    #allocation2 [shape = 'u8[4096]{0}', space=vmem, size = 0x1000, scoped, tag = 'input window, operand 1, single buffered']
    #allocation3 [shape = 's32[1]{0}', space=sflag, size = 0x4, scoped, tag = 'scoped memory for tpu_custom_call.1']
    %8 = vsyncpa [#allocation3], 0
    // Predicated region
    $region2: #{tpu_custom_call.1} parent=1 // pred_check
      _
    $region3: #{tpu_custom_call.1} parent=1 // pred_check_branch
      %10 = sbr.rel (0) target = $region5
    $region4: #{tpu_custom_call.1} parent=1 // pred_region
      _
    $region5: #{tpu_custom_call.1} parent=1 // pred_fallthru
      _
    // Predicated region
    $region6: #{tpu_custom_call.1} parent=1 // pred_check
      _
    $region7: #{tpu_custom_call.1} parent=1 // pred_check_branch
      %12 = sbr.rel (0) target = $region9
    $region8: #{tpu_custom_call.1} parent=1 // pred_region
      %s14 = ssub.s32 128, 128
      %15 = vsyncadd [#allocation3], %s14
      %s17 = sshll.u32 [#allocation2], 4
      %s18 = int_to_ptr.vmem [resolvable:$true] %s17
      %20 = dma.hbm_to_vmem [thread:$0]  %s1, 128, %s18, [#allocation3]
    $region9: #{tpu_custom_call.1} parent=1 // pred_fallthru
      _
    // Predicated region
    $region10: #{tpu_custom_call.1} parent=1 // pred_check
      _
    $region11: #{tpu_custom_call.1} parent=1 // pred_check_branch
      %22 = sbr.rel (0) target = $region13
    $region12: #{tpu_custom_call.1} parent=1 // pred_region
      _
    $region13: #{tpu_custom_call.1} parent=1 // pred_fallthru
      _
    // Predicated region
    $region14: #{tpu_custom_call.1} parent=1 // pred_check
      _
    $region15: #{tpu_custom_call.1} parent=1 // pred_check_branch
      %24 = sbr.rel (0) target = $region17
    $region16: #{tpu_custom_call.1} parent=1 // pred_region
      %25 = dma.done [#allocation3], 128
    $region17: #{tpu_custom_call.1} parent=1 // pred_fallthru
      _
    %v26 = vld [vmem:[%s0] sm:$0xff]
    %v27 = vld [vmem:[#allocation2] sm:$0xff]
    %v28 = vsub.f32 %v27, %v26
    %v29 = vmul.f32 %v28, %v28
    %vm30 = vcmask 261120
    %v31 = vsel %vm30, %v29, 0.0
    %32 = vadd.xlane.f32.xlu0 %v31
    %v33 = vpop.xlane.xlu0 %32
    %v34 = vld [vmem:[%s2] sm:$0xff]
    %v35 = vadd.f32 %v33, 1e-09
    %v36 = vrsqrt.pop %v35
    %v37 = vmul.f32 %v35, %v36
    %vm38 = vcmp.eq.f32.partialorder %v35, inf
    %v39 = vsel %vm38, %v35, %v37
    %vm40 = vcmp.eq.f32.partialorder %v35, 0.0
    %v41 = vand.u32 %v35, 2147483648
    %v42 = vsel %vm40, %v41, %v39
    %v43 = vsub.f32 1.0, %v42
    %v44 = vmax.f32 %v43, 0.0
    %v45 = vmul.f32 %v34, %v33
    %v46 = vsub.f32 1.0, %v34
    %v47 = vmul.f32 %v46, %v44
    %v48 = vmul.f32 %v47, %v44
    %v49 = vadd.f32 %v45, %v48
    %v50 = vmul.f32 %v49, 0.5
    %vm51 = vcmask 7168
    %52 = vst.msk [vmem:[%s3] sm:$0xff] %vm51, %v50
    // Predicated region
    $region18: #{tpu_custom_call.1} parent=1 // pred_check
      _
    $region19: #{tpu_custom_call.1} parent=1 // pred_check_branch
      %54 = sbr.rel (0) target = $region21
    $region20: #{tpu_custom_call.1} parent=1 // pred_region
      _
    $region21: #{tpu_custom_call.1} parent=1 // pred_fallthru
      _
    // Predicated region
    $region22: #{tpu_custom_call.1} parent=1 // pred_check
      _
    $region23: #{tpu_custom_call.1} parent=1 // pred_check_branch
      %56 = sbr.rel (0) target = $region25
    $region24: #{tpu_custom_call.1} parent=1 // pred_region
      _
    $region25: #{tpu_custom_call.1} parent=1 // pred_fallthru
      _
    %57 = vsyncpa [#allocation3], 1

</llo_original>
